<compile_context>
chip_gen: v7x
topology: tpu7x:2x2x1
jax: 0.10.0
libtpu: 0.0.40
codegen_flags: <defaults>
</compile_context>

<pallas_src>
import jax
import jax.numpy as jnp
from jax.experimental import pallas as pl
from jax.experimental.pallas import tpu as pltpu

HIDDEN = 256


def _round_up(x, m):
    return ((x + m - 1) // m) * m


def make_critic_kernel(state_dim):
    def kernel(s_ref, a_ref, w1_ref, b1_ref, w2_ref, b2_ref, w3_ref, b3_ref,
               o_ref):
        dt = w1_ref.dtype  # bf16 MXU operands
        # Layer 1: Linear(state_dim + action_dim -> 256) as two K-slices of w1
        # (the concat(state, action) never materializes in HBM).
        h1 = jnp.dot(s_ref[...].astype(dt), w1_ref[:state_dim, :],
                     preferred_element_type=jnp.float32)
        h1 = h1 + jnp.dot(a_ref[...].astype(dt), w1_ref[state_dim:, :],
                          preferred_element_type=jnp.float32)
        h1 = jnp.maximum(h1 + b1_ref[...], 0.0)
        # Layer 2: Linear(256 -> 256) + ReLU.
        h2 = jnp.dot(h1.astype(dt), w2_ref[...],
                     preferred_element_type=jnp.float32)
        h2 = jnp.maximum(h2 + b2_ref[...], 0.0)
        # Layer 3: Linear(256 -> 1) as an f32 VPU multiply + lane reduction;
        # store a single f32 per row (4 B/row of output HBM traffic).
        q = jnp.sum(h2 * w3_ref[...], axis=-1, keepdims=True)  # (tb, 1)
        o_ref[...] = q + b3_ref[...]

    return kernel


def critic_forward(state, action, params, *, tb=256):
    """state: (B, state_dim) f32, action: (B, action_dim) f32 -> Q: (B, 1) f32."""
    B, state_dim = state.shape
    action_dim = action.shape[1]
    in_dim = state_dim + action_dim

    # Batch tile: at most `tb` rows (256 fills the v6e/v7x MXU M dimension), a
    # multiple of 8 sublanes, and >= 2 tiles whenever the batch allows it so the
    # "parallel" grid axis can shard across both v7x TensorCores.
    tb_eff = min(tb, _round_up(B, 8))
    if B > 128 and pl.cdiv(B, tb_eff) < 2:
        tb_eff = _round_up(pl.cdiv(B, 2), 8)
    n_tiles = pl.cdiv(B, tb_eff)
    b_pad = n_tiles * tb_eff

    if b_pad != B:  # pad the (small) inputs along batch only when needed
        state = jnp.pad(state, ((0, b_pad - B), (0, 0)))
        action = jnp.pad(action, ((0, b_pad - B), (0, 0)))

    # Weights/biases: full-array blocks with a constant index map -> fetched once,
    # resident in VMEM across all batch tiles.
    def resident(arr):
        return pl.BlockSpec(arr.shape, lambda i: (0,) * arr.ndim)

    flops = 2 * b_pad * (in_dim * HIDDEN + HIDDEN * HIDDEN + HIDDEN)
    bytes_accessed = (
        b_pad * (in_dim * 4 + 4)                           # activations in / Q out
        + params["w1"].size * 2 + params["w2"].size * 2    # bf16 weights
        + (params["b1"].size + params["b2"].size
           + params["w3"].size + params["b3"].size) * 4)   # f32 biases + head

    out = pl.pallas_call(
        make_critic_kernel(state_dim),
        out_shape=jax.ShapeDtypeStruct((b_pad, 1), jnp.float32),
        grid=(n_tiles,),
        in_specs=[
            pl.BlockSpec((tb_eff, state_dim), lambda i: (i, 0)),   # batch-tiled state
            pl.BlockSpec((tb_eff, action_dim), lambda i: (i, 0)),  # batch-tiled action
            resident(params["w1"]), resident(params["b1"]),
            resident(params["w2"]), resident(params["b2"]),
            resident(params["w3"]), resident(params["b3"]),
        ],
        out_specs=pl.BlockSpec((tb_eff, 1), lambda i: (i, 0)),
        compiler_params=pltpu.CompilerParams(
            dimension_semantics=("parallel",)),  # shard batch tiles across TCs
        cost_estimate=pl.CostEstimate(flops=flops, transcendentals=0,
                                      bytes_accessed=bytes_accessed),
    )(state, action, params["w1"], params["b1"], params["w2"], params["b2"],
      params["w3"], params["b3"])

    return out[:B]


def init_critic_params(key, state_dim, action_dim, hidden=HIDDEN):
    """PyTorch nn.Linear-style uniform(+-1/sqrt(fan_in)) init.

    Weights are stored (in, out). w1/w2 are bf16 (MXU operands); biases and the
    final 256->1 row vector w3 stay f32 (the head runs on the VPU/XLU).
    """
    in_dim = state_dim + action_dim
    ks = jax.random.split(key, 6)

    def linear(kw, kb, fan_in, fan_out):
        bound = 1.0 / jnp.sqrt(jnp.float32(fan_in))
        w = jax.random.uniform(kw, (fan_in, fan_out), jnp.float32, -bound, bound)
        b = jax.random.uniform(kb, (1, fan_out), jnp.float32, -bound, bound)
        return w, b

    w1, b1 = linear(ks[0], ks[1], in_dim, hidden)
    w2, b2 = linear(ks[2], ks[3], hidden, hidden)
    w3, b3 = linear(ks[4], ks[5], hidden, 1)

    return {
        "w1": w1.astype(jnp.bfloat16), "b1": b1,
        "w2": w2.astype(jnp.bfloat16), "b2": b2,
        "w3": w3.T,                    "b3": b3,   # w3: (1, hidden) f32; b3: (1, 1)
    }


def critic_reference(state, action, params):
    """Pure-JAX reference using the same bf16-MXU / f32-accumulate math."""
    sd = state.shape[-1]
    dt = params["w1"].dtype
    h = (jnp.dot(state.astype(dt), params["w1"][:sd],
                 preferred_element_type=jnp.float32)
         + jnp.dot(action.astype(dt), params["w1"][sd:],
                   preferred_element_type=jnp.float32))
    h = jnp.maximum(h + params["b1"], 0.0)
    h = jnp.dot(h.astype(dt), params["w2"], preferred_element_type=jnp.float32)
    h = jnp.maximum(h + params["b2"], 0.0)
    return jnp.sum(h * params["w3"], axis=-1, keepdims=True) + params["b3"]


if __name__ == "__main__":
    key = jax.random.PRNGKey(0)
    k_param, k_s, k_a = jax.random.split(key, 3)

    batch, state_dim, action_dim = 256, 32, 8
    params = init_critic_params(k_param, state_dim, action_dim)
    state = jax.random.normal(k_s, (batch, state_dim), jnp.float32)
    action = jax.random.normal(k_a, (batch, action_dim), jnp.float32)

    critic_fn = jax.jit(critic_forward)
    q = jax.block_until_ready(critic_fn(state, action, params))

    ref = critic_reference(state, action, params)
    assert q.shape == (batch, 1)
    assert jnp.allclose(q, ref, atol=1e-3, rtol=1e-3), float(
        jnp.max(jnp.abs(q - ref)))

    print("KERNEL_OK")
</pallas_src>

<mosaic_0001>
module attributes {stable_mosaic.version = 11 : i64} {
  func.func @kernel(%arg0: i32, %arg1: memref<128x32xf32, #tpu.memory_space<vmem>>, %arg2: memref<128x8xf32, #tpu.memory_space<vmem>>, %arg3: memref<40x256xbf16, #tpu.memory_space<vmem>>, %arg4: memref<1x256xf32, #tpu.memory_space<vmem>>, %arg5: memref<256x256xbf16, #tpu.memory_space<vmem>>, %arg6: memref<1x256xf32, #tpu.memory_space<vmem>>, %arg7: memref<1x256xf32, #tpu.memory_space<vmem>>, %arg8: memref<1x1xf32, #tpu.memory_space<vmem>>, %arg9: memref<128x1xf32, #tpu.memory_space<vmem>>) attributes {dimension_semantics = [#tpu.dimension_semantics<parallel>], iteration_bounds = array<i64: 2>, scalar_prefetch = 0 : i64, scratch_operands = 0 : i64, tpu.core_type = #tpu.core_type<tc>, window_params = [{transform_indices = @transform_0, window_bounds = array<i64: 128, 32>}, {transform_indices = @transform_1, window_bounds = array<i64: 128, 8>}, {pipeline_mode = #tpu.pipeline_mode<synchronous>, transform_indices = @transform_2, window_bounds = array<i64: 40, 256>}, {pipeline_mode = #tpu.pipeline_mode<synchronous>, transform_indices = @transform_3, window_bounds = array<i64: 1, 256>}, {pipeline_mode = #tpu.pipeline_mode<synchronous>, transform_indices = @transform_4, window_bounds = array<i64: 256, 256>}, {pipeline_mode = #tpu.pipeline_mode<synchronous>, transform_indices = @transform_5, window_bounds = array<i64: 1, 256>}, {pipeline_mode = #tpu.pipeline_mode<synchronous>, transform_indices = @transform_6, window_bounds = array<i64: 1, 256>}, {pipeline_mode = #tpu.pipeline_mode<synchronous>, transform_indices = @transform_7, window_bounds = array<i64: 1, 1>}, {transform_indices = @transform_8, window_bounds = array<i64: 128, 1>}]} {
    %c0 = arith.constant 0 : index
    %c0_0 = arith.constant 0 : index
    %0 = vector.load %arg1[%c0, %c0_0] : memref<128x32xf32, #tpu.memory_space<vmem>>, vector<128x32xf32>
    %1 = arith.truncf %0 : vector<128x32xf32> to vector<128x32xbf16>
    %c0_1 = arith.constant 0 : index
    %c0_2 = arith.constant 0 : index
    %2 = vector.load %arg3[%c0_1, %c0_2] : memref<40x256xbf16, #tpu.memory_space<vmem>>, vector<32x256xbf16>
    %cst = arith.constant dense<0.000000e+00> : vector<128x256xf32>
    %3 = tpu.matmul %1, %2, %cst {dimension_numbers = #tpu.dot_dimension_numbers<[1], [0], [0], [1], [0, 0, 1, 1], [], []>} : vector<128x32xbf16>, vector<32x256xbf16>, vector<128x256xf32> -> vector<128x256xf32>
    %c0_3 = arith.constant 0 : index
    %c0_4 = arith.constant 0 : index
    %4 = vector.load %arg2[%c0_3, %c0_4] : memref<128x8xf32, #tpu.memory_space<vmem>>, vector<128x8xf32>
    %5 = arith.truncf %4 : vector<128x8xf32> to vector<128x8xbf16>
    %c32 = arith.constant 32 : index
    %c0_5 = arith.constant 0 : index
    %6 = vector.load %arg3[%c32, %c0_5] : memref<40x256xbf16, #tpu.memory_space<vmem>>, vector<8x256xbf16>
    %cst_6 = arith.constant dense<0.000000e+00> : vector<128x256xf32>
    %7 = tpu.matmul %5, %6, %cst_6 {dimension_numbers = #tpu.dot_dimension_numbers<[1], [0], [0], [1], [0, 0, 1, 1], [], []>} : vector<128x8xbf16>, vector<8x256xbf16>, vector<128x256xf32> -> vector<128x256xf32>
    %8 = arith.addf %3, %7 : vector<128x256xf32>
    %c0_7 = arith.constant 0 : index
    %c0_8 = arith.constant 0 : index
    %9 = vector.load %arg4[%c0_7, %c0_8] : memref<1x256xf32, #tpu.memory_space<vmem>>, vector<1x256xf32>
    %10 = vector.broadcast %9 : vector<1x256xf32> to vector<128x256xf32>
    %11 = arith.addf %8, %10 : vector<128x256xf32>
    %cst_9 = arith.constant 0.000000e+00 : f32
    %12 = vector.broadcast %cst_9 : f32 to vector<128x256xf32>
    %13 = arith.maximumf %11, %12 : vector<128x256xf32>
    %14 = arith.truncf %13 : vector<128x256xf32> to vector<128x256xbf16>
    %c0_10 = arith.constant 0 : index
    %c0_11 = arith.constant 0 : index
    %15 = vector.load %arg5[%c0_10, %c0_11] : memref<256x256xbf16, #tpu.memory_space<vmem>>, vector<256x256xbf16>
    %cst_12 = arith.constant dense<0.000000e+00> : vector<128x256xf32>
    %16 = tpu.matmul %14, %15, %cst_12 {dimension_numbers = #tpu.dot_dimension_numbers<[1], [0], [0], [1], [0, 0, 1, 1], [], []>} : vector<128x256xbf16>, vector<256x256xbf16>, vector<128x256xf32> -> vector<128x256xf32>
    %c0_13 = arith.constant 0 : index
    %c0_14 = arith.constant 0 : index
    %17 = vector.load %arg6[%c0_13, %c0_14] : memref<1x256xf32, #tpu.memory_space<vmem>>, vector<1x256xf32>
    %18 = vector.broadcast %17 : vector<1x256xf32> to vector<128x256xf32>
    %19 = arith.addf %16, %18 : vector<128x256xf32>
    %cst_15 = arith.constant 0.000000e+00 : f32
    %20 = vector.broadcast %cst_15 : f32 to vector<128x256xf32>
    %21 = arith.maximumf %19, %20 : vector<128x256xf32>
    %c0_16 = arith.constant 0 : index
    %c0_17 = arith.constant 0 : index
    %22 = vector.load %arg7[%c0_16, %c0_17] : memref<1x256xf32, #tpu.memory_space<vmem>>, vector<1x256xf32>
    %23 = vector.broadcast %22 : vector<1x256xf32> to vector<128x256xf32>
    %24 = arith.mulf %21, %23 : vector<128x256xf32>
    %cst_18 = arith.constant dense<0.000000e+00> : vector<128xf32>
    %25 = vector.multi_reduction <add>, %24, %cst_18 [1] : vector<128x256xf32> to vector<128xf32>
    %26 = vector.shape_cast %25 : vector<128xf32> to vector<128x1xf32>
    %c0_19 = arith.constant 0 : index
    %c0_20 = arith.constant 0 : index
    %27 = vector.load %arg8[%c0_19, %c0_20] : memref<1x1xf32, #tpu.memory_space<vmem>>, vector<1x1xf32>
    %28 = vector.broadcast %27 : vector<1x1xf32> to vector<128x1xf32>
    %29 = arith.addf %26, %28 : vector<128x1xf32>
    %c0_21 = arith.constant 0 : index
    %c0_22 = arith.constant 0 : index
    %30 = vector.load %arg9[%c0_21, %c0_22] : memref<128x1xf32, #tpu.memory_space<vmem>>, vector<128x1xf32>
    tpu.vector_store %arg9[%c0_21, %c0_22], %29 {strides = array<i32>} : memref<128x1xf32, #tpu.memory_space<vmem>>, vector<128x1xf32>,
    return
  }
  func.func @transform_0(%arg0: i32) -> (i32, i32) {
    %c0_i32 = arith.constant 0 : i32
    %c0_i32_0 = arith.constant 0 : i32
    return %arg0, %c0_i32 : i32, i32
  }
  func.func @transform_1(%arg0: i32) -> (i32, i32) {
    %c0_i32 = arith.constant 0 : i32
    %c0_i32_0 = arith.constant 0 : i32
    return %arg0, %c0_i32 : i32, i32
  }
  func.func @transform_2(%arg0: i32) -> (i32, i32) {
    %c0_i32 = arith.constant 0 : i32
    %c0_i32_0 = arith.constant 0 : i32
    %c0_i32_1 = arith.constant 0 : i32
    return %c0_i32, %c0_i32_0 : i32, i32
  }
  func.func @transform_3(%arg0: i32) -> (i32, i32) {
    %c0_i32 = arith.constant 0 : i32
    %c0_i32_0 = arith.constant 0 : i32
    %c0_i32_1 = arith.constant 0 : i32
    return %c0_i32, %c0_i32_0 : i32, i32
  }
  func.func @transform_4(%arg0: i32) -> (i32, i32) {
    %c0_i32 = arith.constant 0 : i32
    %c0_i32_0 = arith.constant 0 : i32
    %c0_i32_1 = arith.constant 0 : i32
    return %c0_i32, %c0_i32_0 : i32, i32
  }
  func.func @transform_5(%arg0: i32) -> (i32, i32) {
    %c0_i32 = arith.constant 0 : i32
    %c0_i32_0 = arith.constant 0 : i32
    %c0_i32_1 = arith.constant 0 : i32
    return %c0_i32, %c0_i32_0 : i32, i32
  }
  func.func @transform_6(%arg0: i32) -> (i32, i32) {
    %c0_i32 = arith.constant 0 : i32
    %c0_i32_0 = arith.constant 0 : i32
    %c0_i32_1 = arith.constant 0 : i32
    return %c0_i32, %c0_i32_0 : i32, i32
  }
  func.func @transform_7(%arg0: i32) -> (i32, i32) {
    %c0_i32 = arith.constant 0 : i32
    %c0_i32_0 = arith.constant 0 : i32
    %c0_i32_1 = arith.constant 0 : i32
    return %c0_i32, %c0_i32_0 : i32, i32
  }
  func.func @transform_8(%arg0: i32) -> (i32, i32) {
    %c0_i32 = arith.constant 0 : i32
    %c0_i32_0 = arith.constant 0 : i32
    return %arg0, %c0_i32 : i32, i32
  }
}

</mosaic_0001>

<llo_original>
// kernel: critic_forward.1
$region0: #{critic_forward.1}
  #allocation0 [shape = 'u32[]', space=smem, size = 0x4, offset = 0x4, fixed_abs, tag = 'smem constant byte address 0x4 - core index']
  #allocation1 [shape = 'u32[144,128]{1,0:T(1,128)}', space=vmem, size = 0x12000, scoped, tag = 'internal scratch']
  #allocation2 [shape = 'f32[1,1]{1,0:T(1,128)S(1)}', space=vmem, size = 0x200, scoped, tag = 'scoped memory for critic_forward.1']
  %s0 = inlined_call_operand.vmem [shape: f32[256,32], index: 0, kind: input, shape index: {}]
  %s1 = inlined_call_operand.vmem [shape: f32[256,8], index: 1, kind: input, shape index: {}]
  %s2 = inlined_call_operand.vmem [shape: bf16[40,256], index: 2, kind: input, shape index: {}]
  %s3 = inlined_call_operand.vmem [shape: f32[1,256], index: 3, kind: input, shape index: {}]
  %s4 = inlined_call_operand.vmem [shape: bf16[256,256], index: 4, kind: input, shape index: {}]
  %s5 = inlined_call_operand.vmem [shape: f32[1,256], index: 5, kind: input, shape index: {}]
  %s6 = inlined_call_operand.vmem [shape: f32[1,256], index: 6, kind: input, shape index: {}]
  %s7 = inlined_call_operand.<no memory space> [shape: f32[1,1], index: 7, kind: input, shape index: {}]
  %s8 = inlined_call_operand.vmem [shape: f32[256,1], index: 8, kind: output, shape index: {}]
  %s9 = sld [smem:[#allocation0]]
  $region65: #{critic_forward.1} parent=0
    _
  %s11 = ssub.s32 1, %s9
  %s12 = scalar_select 0, %s11, %s9
  %v13 = vstv %s7
  %14 = vst [vmem:[#allocation2] sm:$0x1] %v13
  loop: start=0, step=1, limit=4
  $region2: #{critic_forward.1} parent=0 // loop_pre_header
    _
  $region3: #{critic_forward.1} parent=0 // loop_header
    %s16 = sphi 0, %s20
    %p17 = scmp.ge.s32.totalorder %s16, 4
    %s26 = sphi 0, %s28
    %s29 = sphi 0, %s26
    %s30 = sphi 0, %s29
    %s46 = sphi 0, %s30
    %s52 = sphi 0, %s54
    %s55 = sphi 0, %s52
    %s56 = sphi 0, %s55
    %s72 = sphi 0, %s56
    %s76 = sphi 0, %s76
    %s78 = sphi 0, %s76
    %s79 = sphi 0, %s78
    %s93 = sphi 0, %s79
    %s97 = sphi 0, %s97
    %s99 = sphi 0, %s97
    %s100 = sphi 0, %s99
    %s114 = sphi 0, %s100
    %s118 = sphi 0, %s118
    %s120 = sphi 0, %s118
    %s121 = sphi 0, %s120
    %s135 = sphi 0, %s121
    %s139 = sphi 0, %s139
    %s141 = sphi 0, %s139
    %s142 = sphi 0, %s141
    %s156 = sphi 0, %s142
    %s160 = sphi 0, %s160
    %s162 = sphi 0, %s160
    %s163 = sphi 0, %s162
    %s177 = sphi 0, %s163
    %s181 = sphi 0, %s181
    %s183 = sphi 0, %s181
    %s184 = sphi 0, %s183
    %s198 = sphi 0, %s184
    %s204 = sphi 0, %s206
    %s207 = sphi 0, %s204
    %s208 = sphi 0, %s207
    %s224 = sphi 0, %s208
  $region4: #{critic_forward.1} parent=0 // loop_header_branch
    %19 = sbr.rel (%p17) target = $region8
  $region5: #{critic_forward.1} parent=0 // loop_body
    %s21 = ssub.s32 %s16, 1
    %s22 = ssub.s32 %s16, 2
    %s23 = sadd.s32 %s16, 1
    %s24 = ssub.s32 %s16, %s23
    %p25 = scmp.eq.s32.totalorder %s24, 0
    %s27 = sadd.s32 %s26, 1
    %s28 = scalar_select %p25, %s26, %s27
    %p31 = pneg %p25
    %p32 = scmp.eq.s32.totalorder %s16, 1
    %p33 = por %p31, %p32
    %p34 = scmp.ne.s32.totalorder %s26, %s29
    %p35 = scmp.eq.s32.totalorder %s16, 0
    %p36 = por %p34, %p35
    %p37 = scmp.ne.s32.totalorder %s26, %s29
    %p38 = scmp.eq.s32.totalorder %s21, 1
    %p39 = por %p37, %p38
    %p40 = scmp.ne.s32.totalorder %s29, %s30
    %p41 = scmp.eq.s32.totalorder %s21, 0
    %p42 = por %p40, %p41
    %p43 = scmp.ne.s32.totalorder %s29, %s30
    %p44 = scmp.eq.s32.totalorder %s22, 1
    %p45 = por %p43, %p44
    %p47 = scmp.ne.s32.totalorder %s30, %s46
    %p48 = scmp.eq.s32.totalorder %s22, 0
    %p49 = por %p47, %p48
    %s50 = ssub.s32 %s16, %s23
    %p51 = scmp.eq.s32.totalorder %s50, 0
    %s53 = sadd.s32 %s52, 1
    %s54 = scalar_select %p51, %s52, %s53
    %p57 = pneg %p51
    %p58 = scmp.eq.s32.totalorder %s16, 1
    %p59 = por %p57, %p58
    %p60 = scmp.ne.s32.totalorder %s52, %s55
    %p61 = scmp.eq.s32.totalorder %s16, 0
    %p62 = por %p60, %p61
    %p63 = scmp.ne.s32.totalorder %s52, %s55
    %p64 = scmp.eq.s32.totalorder %s21, 1
    %p65 = por %p63, %p64
    %p66 = scmp.ne.s32.totalorder %s55, %s56
    %p67 = scmp.eq.s32.totalorder %s21, 0
    %p68 = por %p66, %p67
    %p69 = scmp.ne.s32.totalorder %s55, %s56
    %p70 = scmp.eq.s32.totalorder %s22, 1
    %p71 = por %p69, %p70
    %p73 = scmp.ne.s32.totalorder %s56, %s72
    %p74 = scmp.eq.s32.totalorder %s22, 0
    %p75 = por %p73, %p74
    %s77 = sadd.s32 %s76, 1
    %p80 = scmp.eq.s32.totalorder %s16, 1
    %p81 = scmp.ne.s32.totalorder %s76, %s78
    %p82 = scmp.eq.s32.totalorder %s16, 0
    %p83 = por %p81, %p82
    %p84 = scmp.ne.s32.totalorder %s76, %s78
    %p85 = scmp.eq.s32.totalorder %s21, 1
    %p86 = por %p84, %p85
    %p87 = scmp.ne.s32.totalorder %s78, %s79
    %p88 = scmp.eq.s32.totalorder %s21, 0
    %p89 = por %p87, %p88
    %p90 = scmp.ne.s32.totalorder %s78, %s79
    %p91 = scmp.eq.s32.totalorder %s22, 1
    %p92 = por %p90, %p91
    %p94 = scmp.ne.s32.totalorder %s79, %s93
    %p95 = scmp.eq.s32.totalorder %s22, 0
    %p96 = por %p94, %p95
    %s98 = sadd.s32 %s97, 1
    %p101 = scmp.eq.s32.totalorder %s16, 1
    %p102 = scmp.ne.s32.totalorder %s97, %s99
    %p103 = scmp.eq.s32.totalorder %s16, 0
    %p104 = por %p102, %p103
    %p105 = scmp.ne.s32.totalorder %s97, %s99
    %p106 = scmp.eq.s32.totalorder %s21, 1
    %p107 = por %p105, %p106
    %p108 = scmp.ne.s32.totalorder %s99, %s100
    %p109 = scmp.eq.s32.totalorder %s21, 0
    %p110 = por %p108, %p109
    %p111 = scmp.ne.s32.totalorder %s99, %s100
    %p112 = scmp.eq.s32.totalorder %s22, 1
    %p113 = por %p111, %p112
    %p115 = scmp.ne.s32.totalorder %s100, %s114
    %p116 = scmp.eq.s32.totalorder %s22, 0
    %p117 = por %p115, %p116
    %s119 = sadd.s32 %s118, 1
    %p122 = scmp.eq.s32.totalorder %s16, 1
    %p123 = scmp.ne.s32.totalorder %s118, %s120
    %p124 = scmp.eq.s32.totalorder %s16, 0
    %p125 = por %p123, %p124
    %p126 = scmp.ne.s32.totalorder %s118, %s120
    %p127 = scmp.eq.s32.totalorder %s21, 1
    %p128 = por %p126, %p127
    %p129 = scmp.ne.s32.totalorder %s120, %s121
    %p130 = scmp.eq.s32.totalorder %s21, 0
    %p131 = por %p129, %p130
    %p132 = scmp.ne.s32.totalorder %s120, %s121
    %p133 = scmp.eq.s32.totalorder %s22, 1
    %p134 = por %p132, %p133
    %p136 = scmp.ne.s32.totalorder %s121, %s135
    %p137 = scmp.eq.s32.totalorder %s22, 0
    %p138 = por %p136, %p137
    %s140 = sadd.s32 %s139, 1
    %p143 = scmp.eq.s32.totalorder %s16, 1
    %p144 = scmp.ne.s32.totalorder %s139, %s141
    %p145 = scmp.eq.s32.totalorder %s16, 0
    %p146 = por %p144, %p145
    %p147 = scmp.ne.s32.totalorder %s139, %s141
    %p148 = scmp.eq.s32.totalorder %s21, 1
    %p149 = por %p147, %p148
    %p150 = scmp.ne.s32.totalorder %s141, %s142
    %p151 = scmp.eq.s32.totalorder %s21, 0
    %p152 = por %p150, %p151
    %p153 = scmp.ne.s32.totalorder %s141, %s142
    %p154 = scmp.eq.s32.totalorder %s22, 1
    %p155 = por %p153, %p154
    %p157 = scmp.ne.s32.totalorder %s142, %s156
    %p158 = scmp.eq.s32.totalorder %s22, 0
    %p159 = por %p157, %p158
    %s161 = sadd.s32 %s160, 1
    %p164 = scmp.eq.s32.totalorder %s16, 1
    %p165 = scmp.ne.s32.totalorder %s160, %s162
    %p166 = scmp.eq.s32.totalorder %s16, 0
    %p167 = por %p165, %p166
    %p168 = scmp.ne.s32.totalorder %s160, %s162
    %p169 = scmp.eq.s32.totalorder %s21, 1
    %p170 = por %p168, %p169
    %p171 = scmp.ne.s32.totalorder %s162, %s163
    %p172 = scmp.eq.s32.totalorder %s21, 0
    %p173 = por %p171, %p172
    %p174 = scmp.ne.s32.totalorder %s162, %s163
    %p175 = scmp.eq.s32.totalorder %s22, 1
    %p176 = por %p174, %p175
    %p178 = scmp.ne.s32.totalorder %s163, %s177
    %p179 = scmp.eq.s32.totalorder %s22, 0
    %p180 = por %p178, %p179
    %s182 = sadd.s32 %s181, 1
    %p185 = scmp.eq.s32.totalorder %s16, 1
    %p186 = scmp.ne.s32.totalorder %s181, %s183
    %p187 = scmp.eq.s32.totalorder %s16, 0
    %p188 = por %p186, %p187
    %p189 = scmp.ne.s32.totalorder %s181, %s183
    %p190 = scmp.eq.s32.totalorder %s21, 1
    %p191 = por %p189, %p190
    %p192 = scmp.ne.s32.totalorder %s183, %s184
    %p193 = scmp.eq.s32.totalorder %s21, 0
    %p194 = por %p192, %p193
    %p195 = scmp.ne.s32.totalorder %s183, %s184
    %p196 = scmp.eq.s32.totalorder %s22, 1
    %p197 = por %p195, %p196
    %p199 = scmp.ne.s32.totalorder %s184, %s198
    %p200 = scmp.eq.s32.totalorder %s22, 0
    %p201 = por %p199, %p200
    %s202 = ssub.s32 %s16, %s23
    %p203 = scmp.eq.s32.totalorder %s202, 0
    %s205 = sadd.s32 %s204, 1
    %s206 = scalar_select %p203, %s204, %s205
    %p209 = pneg %p203
    %p210 = scmp.eq.s32.totalorder %s16, 1
    %p211 = por %p209, %p210
    %p212 = scmp.ne.s32.totalorder %s204, %s207
    %p213 = scmp.eq.s32.totalorder %s16, 0
    %p214 = por %p212, %p213
    %p215 = scmp.ne.s32.totalorder %s204, %s207
    %p216 = scmp.eq.s32.totalorder %s21, 1
    %p217 = por %p215, %p216
    %p218 = scmp.ne.s32.totalorder %s207, %s208
    %p219 = scmp.eq.s32.totalorder %s21, 0
    %p220 = por %p218, %p219
    %p221 = scmp.ne.s32.totalorder %s207, %s208
    %p222 = scmp.eq.s32.totalorder %s22, 1
    %p223 = por %p221, %p222
    %p225 = scmp.ne.s32.totalorder %s208, %s224
    %p226 = scmp.eq.s32.totalorder %s22, 0
    %p227 = por %p225, %p226
    %p228 = scmp.le.s32.totalorder 1, %s16
    %p229 = scmp.lt.s32.totalorder %s16, 3
    %p230 = pnand %p228, %p229
    %p231 = pneg %p230
    // Predicated region
    $region9: #{critic_forward.1} parent=5 // pred_check
      _
    $region10: #{critic_forward.1} parent=5 // pred_check_branch
      %233 = sbr.rel (%p230) target = $region12
    $region11: #{critic_forward.1} parent=5 // pred_region
      %s234 = ssub.s32 %s16, 1
      // Predicated region
      $region13: #{critic_forward.1} parent=11 // pred_check
        %p235 = pneg %p89
      $region14: #{critic_forward.1} parent=11 // pred_check_branch
        %237 = sbr.rel (%p235) target = $region16
      $region15: #{critic_forward.1} parent=11 // pred_region
        _
      $region16: #{critic_forward.1} parent=11 // pred_fallthru
        _
      // Predicated region
      $region17: #{critic_forward.1} parent=11 // pred_check
        %p238 = pneg %p110
      $region18: #{critic_forward.1} parent=11 // pred_check_branch
        %240 = sbr.rel (%p238) target = $region20
      $region19: #{critic_forward.1} parent=11 // pred_region
        _
      $region20: #{critic_forward.1} parent=11 // pred_fallthru
        _
      // Predicated region
      $region21: #{critic_forward.1} parent=11 // pred_check
        %p241 = pneg %p131
      $region22: #{critic_forward.1} parent=11 // pred_check_branch
        %243 = sbr.rel (%p241) target = $region24
      $region23: #{critic_forward.1} parent=11 // pred_region
        _
      $region24: #{critic_forward.1} parent=11 // pred_fallthru
        _
      // Predicated region
      $region25: #{critic_forward.1} parent=11 // pred_check
        %p244 = pneg %p152
      $region26: #{critic_forward.1} parent=11 // pred_check_branch
        %246 = sbr.rel (%p244) target = $region28
      $region27: #{critic_forward.1} parent=11 // pred_region
        _
      $region28: #{critic_forward.1} parent=11 // pred_fallthru
        _
      // Predicated region
      $region29: #{critic_forward.1} parent=11 // pred_check
        %p247 = pneg %p173
      $region30: #{critic_forward.1} parent=11 // pred_check_branch
        %249 = sbr.rel (%p247) target = $region32
      $region31: #{critic_forward.1} parent=11 // pred_region
        _
      $region32: #{critic_forward.1} parent=11 // pred_fallthru
        _
      // Predicated region
      $region33: #{critic_forward.1} parent=11 // pred_check
        %p250 = pneg %p194
      $region34: #{critic_forward.1} parent=11 // pred_check_branch
        %252 = sbr.rel (%p250) target = $region36
      $region35: #{critic_forward.1} parent=11 // pred_region
        _
      $region36: #{critic_forward.1} parent=11 // pred_fallthru
        _
    $region12: #{critic_forward.1} parent=5 // pred_fallthru
      _
    %p253 = scmp.lt.s32.totalorder %s16, 2
    // Predicated region
    $region37: #{critic_forward.1} parent=5 // pred_check
      %p254 = pneg %p253
    $region38: #{critic_forward.1} parent=5 // pred_check_branch
      %256 = sbr.rel (%p254) target = $region40
    $region39: #{critic_forward.1} parent=5 // pred_region
      // Predicated region
      $region41: #{critic_forward.1} parent=39 // pred_check
        %p257 = pneg %p36
      $region42: #{critic_forward.1} parent=39 // pred_check_branch
        %259 = sbr.rel (%p257) target = $region44
      $region43: #{critic_forward.1} parent=39 // pred_region
        %s260 = smul.u32 16, %s16
        %p261 = scmp.lt.s32.totalorder %s260, 31
        %s262 = scalar_select %p261, %s260, 31
        %s263 = smul.addr %s262, 8
        %s264 = scalar_lea.vmem %s0, %s263
        %s265 = smul.u32 16, %s16
      $region44: #{critic_forward.1} parent=39 // pred_fallthru
        _
      // Predicated region
      $region45: #{critic_forward.1} parent=39 // pred_check
        %p266 = pneg %p62
      $region46: #{critic_forward.1} parent=39 // pred_check_branch
        %268 = sbr.rel (%p266) target = $region48
      $region47: #{critic_forward.1} parent=39 // pred_region
        %s269 = smul.u32 16, %s16
        %p270 = scmp.lt.s32.totalorder %s269, 31
        %s271 = scalar_select %p270, %s269, 31
        %s272 = smul.addr %s271, 8
        %s273 = scalar_lea.vmem %s1, %s272
        %s274 = smul.u32 16, %s16
      $region48: #{critic_forward.1} parent=39 // pred_fallthru
        _
    $region40: #{critic_forward.1} parent=5 // pred_fallthru
      _
    %p275 = scmp.le.s32.totalorder 1, %s16
    %p276 = scmp.lt.s32.totalorder %s16, 3
    %p277 = pnand %p275, %p276
    %p278 = pneg %p277
    // Predicated region
    $region49: #{critic_forward.1} parent=5 // pred_check
      _
    $region50: #{critic_forward.1} parent=5 // pred_check_branch
      %280 = sbr.rel (%p277) target = $region52
    $region51: #{critic_forward.1} parent=5 // pred_region
      %s281 = ssub.s32 %s16, 1
      %s282 = smul.u32 16, %s21
      %p283 = scmp.lt.s32.totalorder %s282, 31
      %s284 = scalar_select %p283, %s282, 31
      %s285 = smul.addr %s284, 8
      %s286 = scalar_lea.vmem %s0, %s285
      %p287 = pneg %p42
      %p288 = pneg %p39
      %s289 = smul.u32 16, %s21
      %p290 = scmp.lt.s32.totalorder %s289, 31
      %s291 = scalar_select %p290, %s289, 31
      %s292 = smul.addr %s291, 8
      %s293 = scalar_lea.vmem %s1, %s292
      %p294 = pneg %p68
      %p295 = pneg %p65
      %p296 = pneg %p89
      %p297 = pneg %p86
      %p298 = pneg %p110
      %p299 = pneg %p107
      %p300 = pneg %p131
      %p301 = pneg %p128
      %p302 = pneg %p152
      %p303 = pneg %p149
      %p304 = pneg %p173
      %p305 = pneg %p170
      %p306 = pneg %p194
      %p307 = pneg %p191
      %p308 = pneg %p220
      %p309 = pneg %p217
      %s310 = smul.u32 16, %s21
      %p311 = scmp.lt.s32.totalorder %s310, 31
      %s312 = scalar_select %p311, %s310, 31
      %s313 = smul.addr %s312, 8
      %s314 = scalar_lea.vmem %s8, %s313
      %s315 = smul.u32 16, %s21
      %p316 = scmp.lt.s32.totalorder %s315, 31
      %s317 = scalar_select %p316, %s315, 31
      %s318 = smul.addr %s317, 8
      %s319 = scalar_lea.vmem %s0, %s318
      %s320 = smul.u32 16, %s21
      %s321 = smul.u32 16, %s21
      %p322 = scmp.lt.s32.totalorder %s321, 31
      %s323 = scalar_select %p322, %s321, 31
      %s324 = smul.addr %s323, 8
      %s325 = scalar_lea.vmem %s1, %s324
      %s326 = smul.u32 16, %s21
      %s327 = smul.u32 16, %s21
      %p328 = scmp.lt.s32.totalorder %s327, 31
      %s329 = scalar_select %p328, %s327, 31
      %s330 = smul.addr %s329, 8
      %s331 = scalar_lea.vmem %s8, %s330
      %s332 = smul.u32 16, %s21
      %v334 = vld [vmem:[%s319] sm:$0xff]
      %v335 = vld [vmem:[%s319 + $0x8] sm:$0xff]
      %v336 = vld [vmem:[%s319 + $0x10] sm:$0xff]
      %v337 = vld [vmem:[%s319 + $0x18] sm:$0xff]
      %v338 = vld [vmem:[%s319 + $0x20] sm:$0xff]
      %v339 = vld [vmem:[%s319 + $0x28] sm:$0xff]
      %v340 = vld [vmem:[%s319 + $0x30] sm:$0xff]
      %v341 = vld [vmem:[%s319 + $0x38] sm:$0xff]
      %v342 = vld [vmem:[%s319 + $0x40] sm:$0xff]
      %v343 = vld [vmem:[%s319 + $0x48] sm:$0xff]
      %v344 = vld [vmem:[%s319 + $0x50] sm:$0xff]
      %v345 = vld [vmem:[%s319 + $0x58] sm:$0xff]
      %v346 = vld [vmem:[%s319 + $0x60] sm:$0xff]
      %v347 = vld [vmem:[%s319 + $0x68] sm:$0xff]
      %v348 = vld [vmem:[%s319 + $0x70] sm:$0xff]
      %v349 = vld [vmem:[%s319 + $0x78] sm:$0xff]
      %v350 = vpack.c.bf16 %v335, %v334
      %v351 = vpack.c.bf16 %v337, %v336
      %v352 = vpack.c.bf16 %v339, %v338
      %v353 = vpack.c.bf16 %v341, %v340
      %v354 = vpack.c.bf16 %v343, %v342
      %v355 = vpack.c.bf16 %v345, %v344
      %v356 = vpack.c.bf16 %v347, %v346
      %v357 = vpack.c.bf16 %v349, %v348
      %v358 = vld [vmem:[%s2] sm:$0xff]
      %v359 = vld [vmem:[%s2 + $0x8] sm:$0xff]
      %v360 = vld [vmem:[%s2 + $0x10] sm:$0xff]
      %v361 = vld [vmem:[%s2 + $0x18] sm:$0xff]
      %v362 = vld [vmem:[%s325] sm:$0xff]
      %v363 = vld [vmem:[%s325 + $0x8] sm:$0xff]
      %v364 = vld [vmem:[%s325 + $0x10] sm:$0xff]
      %v365 = vld [vmem:[%s325 + $0x18] sm:$0xff]
      %v366 = vld [vmem:[%s325 + $0x20] sm:$0xff]
      %v367 = vld [vmem:[%s325 + $0x28] sm:$0xff]
      %v368 = vld [vmem:[%s325 + $0x30] sm:$0xff]
      %v369 = vld [vmem:[%s325 + $0x38] sm:$0xff]
      %v370 = vld [vmem:[%s325 + $0x40] sm:$0xff]
      %v371 = vld [vmem:[%s325 + $0x48] sm:$0xff]
      %v372 = vld [vmem:[%s325 + $0x50] sm:$0xff]
      %v373 = vld [vmem:[%s325 + $0x58] sm:$0xff]
      %v374 = vld [vmem:[%s325 + $0x60] sm:$0xff]
      %v375 = vld [vmem:[%s325 + $0x68] sm:$0xff]
      %v376 = vld [vmem:[%s325 + $0x70] sm:$0xff]
      %v377 = vld [vmem:[%s325 + $0x78] sm:$0xff]
      %v378 = vpack.c.bf16 %v363, %v362
      %v379 = vpack.c.bf16 %v365, %v364
      %v380 = vpack.c.bf16 %v367, %v366
      %v381 = vpack.c.bf16 %v369, %v368
      %v382 = vpack.c.bf16 %v371, %v370
      %v383 = vpack.c.bf16 %v373, %v372
      %v384 = vpack.c.bf16 %v375, %v374
      %v385 = vpack.c.bf16 %v377, %v376
      %v386 = vld [vmem:[%s2 + $0x20] sm:$0xff]
      %v388 = vunpack.c.l.b16 %v386
      %v389 = vunpack.c.h.b16 %v386
      %v390 = vpack.c.b16 %v388, %v388
      %v391 = vpack.c.b16 %v389, %v389
      %vm392 = vcmask 64512
      %v394 = vsel %vm392, %v378, 0
      %v397 = vsel %vm392, %v379, 0
      %v400 = vsel %vm392, %v380, 0
      %v403 = vsel %vm392, %v381, 0
      %v406 = vsel %vm392, %v382, 0
      %v409 = vsel %vm392, %v383, 0
      %v412 = vsel %vm392, %v384, 0
      %v415 = vsel %vm392, %v385, 0
      %vm417 = vcmask 1043456
      %v419 = vsel %vm417, %v390, 0
      %v422 = vsel %vm417, %v391, 0
      %424 = vmatprep.subr.bf16.mxu0 %v422
      %425 = vmatpush1.bf16.msra.mxu0 %v419
      %426 = vmatprep.subr.bf16.mxu0 0
      %427 = vmatpush1.bf16.msra.mxu0 0
      %428 = vmatprep.subr.bf16.mxu0 0
      %429 = vmatpush1.bf16.msra.mxu0 0
      %430 = vmatprep.subr.bf16.mxu0 0
      %431 = vmatpush1.bf16.msra.mxu0 0
      %432 = vmatprep.subr.bf16.mxu0 0
      %433 = vmatpush1.bf16.msra.mxu0 0
      %434 = vmatprep.subr.bf16.mxu0 0
      %435 = vmatpush1.bf16.msra.mxu0 0
      %436 = vmatprep.subr.bf16.mxu0 0
      %437 = vmatpush1.bf16.msra.mxu0 0
      %438 = vmatprep.subr.bf16.mxu0 0
      %439 = vmatpush1.bf16.msra.mxu0 0
      %440 = vmatprep.subr.bf16.mxu0 0
      %441 = vmatpush1.bf16.msra.mxu0 0
      %442 = vmatprep.subr.bf16.mxu0 0
      %443 = vmatpush1.bf16.msra.mxu0 0
      %444 = vmatprep.subr.bf16.mxu0 0
      %445 = vmatpush1.bf16.msra.mxu0 0
      %446 = vmatprep.subr.bf16.mxu0 0
      %447 = vmatpush1.bf16.msra.mxu0 0
      %448 = vmatprep.subr.bf16.mxu0 0
      %449 = vmatpush1.bf16.msra.mxu0 0
      %450 = vmatprep.subr.bf16.mxu0 0
      %451 = vmatpush1.bf16.msra.mxu0 0
      %452 = vmatprep.subr.bf16.mxu0 0
      %453 = vmatpush1.bf16.msra.mxu0 0
      %454 = vmatprep.subr.bf16.mxu0 0
      %455 = vmatpush1.bf16.msra.mxu0 0
      %456 = vmatprep.mubr.bf16.mxu0 0
      %457 = vmatmul.mubr.bf16.gmra.mrb[0].mxu0 %v394
      %v458 = vpop.f32.mrb[0].mxu0
      %v459 = vadd.f32 0.0, %v458
      %v460 = vpop.f32.mrb[0].mxu0
      %v461 = vadd.f32 0.0, %v460
      %v462 = vpop.f32.mrb[0].mxu0
      %v463 = vadd.f32 0.0, %v462
      %v464 = vpop.f32.mrb[0].mxu0
      %v465 = vadd.f32 0.0, %v464
      %466 = vmatprep.mubr.bf16.mxu0 0
      %467 = vmatmul.mubr.bf16.gmra.mrb[0].mxu0 %v397
      %v468 = vpop.f32.mrb[0].mxu0
      %v469 = vadd.f32 0.0, %v468
      %v470 = vpop.f32.mrb[0].mxu0
      %v471 = vadd.f32 0.0, %v470
      %v472 = vpop.f32.mrb[0].mxu0
      %v473 = vadd.f32 0.0, %v472
      %v474 = vpop.f32.mrb[0].mxu0
      %v475 = vadd.f32 0.0, %v474
      %476 = vmatprep.mubr.bf16.mxu0 0
      %477 = vmatmul.mubr.bf16.gmra.mrb[0].mxu0 %v400
      %v478 = vpop.f32.mrb[0].mxu0
      %v479 = vadd.f32 0.0, %v478
      %v480 = vpop.f32.mrb[0].mxu0
      %v481 = vadd.f32 0.0, %v480
      %v482 = vpop.f32.mrb[0].mxu0
      %v483 = vadd.f32 0.0, %v482
      %v484 = vpop.f32.mrb[0].mxu0
      %v485 = vadd.f32 0.0, %v484
      %486 = vmatprep.mubr.bf16.mxu0 0
      %487 = vmatmul.mubr.bf16.gmra.mrb[0].mxu0 %v403
      %v488 = vpop.f32.mrb[0].mxu0
      %v489 = vadd.f32 0.0, %v488
      %v490 = vpop.f32.mrb[0].mxu0
      %v491 = vadd.f32 0.0, %v490
      %v492 = vpop.f32.mrb[0].mxu0
      %v493 = vadd.f32 0.0, %v492
      %v494 = vpop.f32.mrb[0].mxu0
      %v495 = vadd.f32 0.0, %v494
      %496 = vmatprep.mubr.bf16.mxu0 0
      %497 = vmatmul.mubr.bf16.gmra.mrb[0].mxu0 %v406
      %v498 = vpop.f32.mrb[0].mxu0
      %v499 = vadd.f32 0.0, %v498
      %v500 = vpop.f32.mrb[0].mxu0
      %v501 = vadd.f32 0.0, %v500
      %v502 = vpop.f32.mrb[0].mxu0
      %v503 = vadd.f32 0.0, %v502
      %v504 = vpop.f32.mrb[0].mxu0
      %v505 = vadd.f32 0.0, %v504
      %506 = vmatprep.mubr.bf16.mxu0 0
      %507 = vmatmul.mubr.bf16.gmra.mrb[0].mxu0 %v409
      %v508 = vpop.f32.mrb[0].mxu0
      %v509 = vadd.f32 0.0, %v508
      %v510 = vpop.f32.mrb[0].mxu0
      %v511 = vadd.f32 0.0, %v510
      %v512 = vpop.f32.mrb[0].mxu0
      %v513 = vadd.f32 0.0, %v512
      %v514 = vpop.f32.mrb[0].mxu0
      %v515 = vadd.f32 0.0, %v514
      %516 = vmatprep.mubr.bf16.mxu0 0
      %517 = vmatmul.mubr.bf16.gmra.mrb[0].mxu0 %v412
      %v518 = vpop.f32.mrb[0].mxu0
      %v519 = vadd.f32 0.0, %v518
      %v520 = vpop.f32.mrb[0].mxu0
      %v521 = vadd.f32 0.0, %v520
      %v522 = vpop.f32.mrb[0].mxu0
      %v523 = vadd.f32 0.0, %v522
      %v524 = vpop.f32.mrb[0].mxu0
      %v525 = vadd.f32 0.0, %v524
      %526 = vmatprep.mubr.bf16.mxu0 0
      %527 = vmatmul.mubr.bf16.gmra.mrb[0].mxu0 %v415
      %v528 = vpop.f32.mrb[0].mxu0
      %v529 = vadd.f32 0.0, %v528
      %v530 = vpop.f32.mrb[0].mxu0
      %v531 = vadd.f32 0.0, %v530
      %v532 = vpop.f32.mrb[0].mxu0
      %v533 = vadd.f32 0.0, %v532
      %v534 = vpop.f32.mrb[0].mxu0
      %v535 = vadd.f32 0.0, %v534
      %536 = vdwg.mxu0
      %v541 = vunpack.c.l.b16 %v358
      %v542 = vunpack.c.h.b16 %v358
      %v543 = vunpack.c.l.b16 %v359
      %v544 = vunpack.c.h.b16 %v359
      %v545 = vunpack.c.l.b16 %v360
      %v546 = vunpack.c.h.b16 %v360
      %v547 = vunpack.c.l.b16 %v361
      %v548 = vunpack.c.h.b16 %v361
      %v549 = vpack.c.b16 %v543, %v541
      %v550 = vpack.c.b16 %v544, %v542
      %v551 = vpack.c.b16 %v547, %v545
      %v552 = vpack.c.b16 %v548, %v546
      %vm557 = vcmask 261120
      %v559 = vsel %vm557, %v350, 0
      %v562 = vsel %vm557, %v351, 0
      %v565 = vsel %vm557, %v352, 0
      %v568 = vsel %vm557, %v353, 0
      %v571 = vsel %vm557, %v354, 0
      %v574 = vsel %vm557, %v355, 0
      %v577 = vsel %vm557, %v356, 0
      %v580 = vsel %vm557, %v357, 0
      %582 = vmatprep.subr.bf16.mxu0 %v550
      %583 = vmatpush1.bf16.msra.mxu0 %v549
      %584 = vmatprep.subr.bf16.mxu0 %v552
      %585 = vmatpush1.bf16.msra.mxu0 %v551
      %586 = vmatprep.subr.bf16.mxu0 0
      %587 = vmatpush1.bf16.msra.mxu0 0
      %588 = vmatprep.subr.bf16.mxu0 0
      %589 = vmatpush1.bf16.msra.mxu0 0
      %590 = vmatprep.subr.bf16.mxu0 0
      %591 = vmatpush1.bf16.msra.mxu0 0
      %592 = vmatprep.subr.bf16.mxu0 0
      %593 = vmatpush1.bf16.msra.mxu0 0
      %594 = vmatprep.subr.bf16.mxu0 0
      %595 = vmatpush1.bf16.msra.mxu0 0
      %596 = vmatprep.subr.bf16.mxu0 0
      %597 = vmatpush1.bf16.msra.mxu0 0
      %598 = vmatprep.subr.bf16.mxu0 0
      %599 = vmatpush1.bf16.msra.mxu0 0
      %600 = vmatprep.subr.bf16.mxu0 0
      %601 = vmatpush1.bf16.msra.mxu0 0
      %602 = vmatprep.subr.bf16.mxu0 0
      %603 = vmatpush1.bf16.msra.mxu0 0
      %604 = vmatprep.subr.bf16.mxu0 0
      %605 = vmatpush1.bf16.msra.mxu0 0
      %606 = vmatprep.subr.bf16.mxu0 0
      %607 = vmatpush1.bf16.msra.mxu0 0
      %608 = vmatprep.subr.bf16.mxu0 0
      %609 = vmatpush1.bf16.msra.mxu0 0
      %610 = vmatprep.subr.bf16.mxu0 0
      %611 = vmatpush1.bf16.msra.mxu0 0
      %612 = vmatprep.subr.bf16.mxu0 0
      %613 = vmatpush1.bf16.msra.mxu0 0
      %614 = vmatprep.mubr.bf16.mxu0 0
      %615 = vmatmul.mubr.bf16.gmra.mrb[0].mxu0 %v559
      %v616 = vpop.f32.mrb[0].mxu0
      %v617 = vadd.f32 %v459, %v616
      %v618 = vpop.f32.mrb[0].mxu0
      %v619 = vadd.f32 %v461, %v618
      %v620 = vpop.f32.mrb[0].mxu0
      %v621 = vadd.f32 %v463, %v620
      %v622 = vpop.f32.mrb[0].mxu0
      %v623 = vadd.f32 %v465, %v622
      %624 = vmatprep.mubr.bf16.mxu0 0
      %625 = vmatmul.mubr.bf16.gmra.mrb[0].mxu0 %v562
      %v626 = vpop.f32.mrb[0].mxu0
      %v627 = vadd.f32 %v469, %v626
      %v628 = vpop.f32.mrb[0].mxu0
      %v629 = vadd.f32 %v471, %v628
      %v630 = vpop.f32.mrb[0].mxu0
      %v631 = vadd.f32 %v473, %v630
      %v632 = vpop.f32.mrb[0].mxu0
      %v633 = vadd.f32 %v475, %v632
      %634 = vmatprep.mubr.bf16.mxu0 0
      %635 = vmatmul.mubr.bf16.gmra.mrb[0].mxu0 %v565
      %v636 = vpop.f32.mrb[0].mxu0
      %v637 = vadd.f32 %v479, %v636
      %v638 = vpop.f32.mrb[0].mxu0
      %v639 = vadd.f32 %v481, %v638
      %v640 = vpop.f32.mrb[0].mxu0
      %v641 = vadd.f32 %v483, %v640
      %v642 = vpop.f32.mrb[0].mxu0
      %v643 = vadd.f32 %v485, %v642
      %644 = vmatprep.mubr.bf16.mxu0 0
      %645 = vmatmul.mubr.bf16.gmra.mrb[0].mxu0 %v568
      %v646 = vpop.f32.mrb[0].mxu0
      %v647 = vadd.f32 %v489, %v646
      %v648 = vpop.f32.mrb[0].mxu0
      %v649 = vadd.f32 %v491, %v648
      %v650 = vpop.f32.mrb[0].mxu0
      %v651 = vadd.f32 %v493, %v650
      %v652 = vpop.f32.mrb[0].mxu0
      %v653 = vadd.f32 %v495, %v652
      %654 = vmatprep.mubr.bf16.mxu0 0
      %655 = vmatmul.mubr.bf16.gmra.mrb[0].mxu0 %v571
      %v656 = vpop.f32.mrb[0].mxu0
      %v657 = vadd.f32 %v499, %v656
      %v658 = vpop.f32.mrb[0].mxu0
      %v659 = vadd.f32 %v501, %v658
      %v660 = vpop.f32.mrb[0].mxu0
      %v661 = vadd.f32 %v503, %v660
      %v662 = vpop.f32.mrb[0].mxu0
      %v663 = vadd.f32 %v505, %v662
      %664 = vmatprep.mubr.bf16.mxu0 0
      %665 = vmatmul.mubr.bf16.gmra.mrb[0].mxu0 %v574
      %v666 = vpop.f32.mrb[0].mxu0
      %v667 = vadd.f32 %v509, %v666
      %v668 = vpop.f32.mrb[0].mxu0
      %v669 = vadd.f32 %v511, %v668
      %v670 = vpop.f32.mrb[0].mxu0
      %v671 = vadd.f32 %v513, %v670
      %v672 = vpop.f32.mrb[0].mxu0
      %v673 = vadd.f32 %v515, %v672
      %674 = vmatprep.mubr.bf16.mxu0 0
      %675 = vmatmul.mubr.bf16.gmra.mrb[0].mxu0 %v577
      %v676 = vpop.f32.mrb[0].mxu0
      %v677 = vadd.f32 %v519, %v676
      %v678 = vpop.f32.mrb[0].mxu0
      %v679 = vadd.f32 %v521, %v678
      %v680 = vpop.f32.mrb[0].mxu0
      %v681 = vadd.f32 %v523, %v680
      %v682 = vpop.f32.mrb[0].mxu0
      %v683 = vadd.f32 %v525, %v682
      %684 = vmatprep.mubr.bf16.mxu0 0
      %685 = vmatmul.mubr.bf16.gmra.mrb[0].mxu0 %v580
      %v686 = vpop.f32.mrb[0].mxu0
      %v687 = vadd.f32 %v529, %v686
      %v688 = vpop.f32.mrb[0].mxu0
      %v689 = vadd.f32 %v531, %v688
      %v690 = vpop.f32.mrb[0].mxu0
      %v691 = vadd.f32 %v533, %v690
      %v692 = vpop.f32.mrb[0].mxu0
      %v693 = vadd.f32 %v535, %v692
      %694 = vdwg.mxu0
      %v695 = vld [vmem:[%s3] sm:$0x3]
      %v697 = vlaneseq
      %v698 = vshrl.u32 %v697, 7
      %v699 = vsub.s32 0, %v698
      %v700 = vrot.slane %v695, %v699
      %v701 = vlaneseq
      %v702 = vshrl.u32 %v701, 7
      %v703 = vsub.s32 1, %v702
      %v704 = vrot.slane %v695, %v703
      %v707 = vadd.f32 %v617, %v700
      %v708 = vadd.f32 %v619, %v704
      %v709 = vadd.f32 %v621, %v700
      %v710 = vadd.f32 %v623, %v704
      %v711 = vadd.f32 %v627, %v700
      %v712 = vadd.f32 %v629, %v704
      %v713 = vadd.f32 %v631, %v700
      %v714 = vadd.f32 %v633, %v704
      %v715 = vadd.f32 %v637, %v700
      %v716 = vadd.f32 %v639, %v704
      %v717 = vadd.f32 %v641, %v700
      %v718 = vadd.f32 %v643, %v704
      %v719 = vadd.f32 %v647, %v700
      %v720 = vadd.f32 %v649, %v704
      %v721 = vadd.f32 %v651, %v700
      %v722 = vadd.f32 %v653, %v704
      %v723 = vadd.f32 %v657, %v700
      %v724 = vadd.f32 %v659, %v704
      %v725 = vadd.f32 %v661, %v700
      %v726 = vadd.f32 %v663, %v704
      %v727 = vadd.f32 %v667, %v700
      %v728 = vadd.f32 %v669, %v704
      %v729 = vadd.f32 %v671, %v700
      %v730 = vadd.f32 %v673, %v704
      %v731 = vadd.f32 %v677, %v700
      %v732 = vadd.f32 %v679, %v704
      %v733 = vadd.f32 %v681, %v700
      %v734 = vadd.f32 %v683, %v704
      %v735 = vadd.f32 %v687, %v700
      %v736 = vadd.f32 %v689, %v704
      %v737 = vadd.f32 %v691, %v700
      %v738 = vadd.f32 %v693, %v704
      %v739 = vmax.f32 %v707, 0.0
      %v740 = vmax.f32 %v708, 0.0
      %v741 = vmax.f32 %v709, 0.0
      %v742 = vmax.f32 %v710, 0.0
      %v743 = vmax.f32 %v711, 0.0
      %v744 = vmax.f32 %v712, 0.0
      %v745 = vmax.f32 %v713, 0.0
      %v746 = vmax.f32 %v714, 0.0
      %v747 = vmax.f32 %v715, 0.0
      %v748 = vmax.f32 %v716, 0.0
      %v749 = vmax.f32 %v717, 0.0
      %v750 = vmax.f32 %v718, 0.0
      %v751 = vmax.f32 %v719, 0.0
      %v752 = vmax.f32 %v720, 0.0
      %v753 = vmax.f32 %v721, 0.0
      %v754 = vmax.f32 %v722, 0.0
      %v755 = vmax.f32 %v723, 0.0
      %v756 = vmax.f32 %v724, 0.0
      %v757 = vmax.f32 %v725, 0.0
      %v758 = vmax.f32 %v726, 0.0
      %v759 = vmax.f32 %v727, 0.0
      %v760 = vmax.f32 %v728, 0.0
      %v761 = vmax.f32 %v729, 0.0
      %v762 = vmax.f32 %v730, 0.0
      %v763 = vmax.f32 %v731, 0.0
      %v764 = vmax.f32 %v732, 0.0
      %v765 = vmax.f32 %v733, 0.0
      %v766 = vmax.f32 %v734, 0.0
      %v767 = vmax.f32 %v735, 0.0
      %v768 = vmax.f32 %v736, 0.0
      %v769 = vmax.f32 %v737, 0.0
      %v770 = vmax.f32 %v738, 0.0
      %v771 = vpack.c.bf16 %v741, %v739
      %v772 = vpack.c.bf16 %v742, %v740
      %v773 = vpack.c.bf16 %v745, %v743
      %v774 = vpack.c.bf16 %v746, %v744
      %v775 = vpack.c.bf16 %v749, %v747
      %v776 = vpack.c.bf16 %v750, %v748
      %v777 = vpack.c.bf16 %v753, %v751
      %v778 = vpack.c.bf16 %v754, %v752
      %v779 = vpack.c.bf16 %v757, %v755
      %v780 = vpack.c.bf16 %v758, %v756
      %v781 = vpack.c.bf16 %v761, %v759
      %v782 = vpack.c.bf16 %v762, %v760
      %v783 = vpack.c.bf16 %v765, %v763
      %v784 = vpack.c.bf16 %v766, %v764
      %v785 = vpack.c.bf16 %v769, %v767
      %v786 = vpack.c.bf16 %v770, %v768
      %v787 = vld [vmem:[%s4] sm:$0xff]
      %v788 = vld [vmem:[%s4 + $0x8] sm:$0xff]
      %v789 = vld [vmem:[%s4 + $0x10] sm:$0xff]
      %v790 = vld [vmem:[%s4 + $0x18] sm:$0xff]
      %v791 = vld [vmem:[%s4 + $0x20] sm:$0xff]
      %v792 = vld [vmem:[%s4 + $0x28] sm:$0xff]
      %v793 = vld [vmem:[%s4 + $0x30] sm:$0xff]
      %v794 = vld [vmem:[%s4 + $0x38] sm:$0xff]
      %v795 = vld [vmem:[%s4 + $0x40] sm:$0xff]
      %v796 = vld [vmem:[%s4 + $0x48] sm:$0xff]
      %v797 = vld [vmem:[%s4 + $0x50] sm:$0xff]
      %v798 = vld [vmem:[%s4 + $0x58] sm:$0xff]
      %v799 = vld [vmem:[%s4 + $0x60] sm:$0xff]
      %v800 = vld [vmem:[%s4 + $0x68] sm:$0xff]
      %v801 = vld [vmem:[%s4 + $0x70] sm:$0xff]
      %v802 = vld [vmem:[%s4 + $0x78] sm:$0xff]
      %v803 = vld [vmem:[%s4 + $0x80] sm:$0xff]
      %v804 = vld [vmem:[%s4 + $0x88] sm:$0xff]
      %v805 = vld [vmem:[%s4 + $0x90] sm:$0xff]
      %v806 = vld [vmem:[%s4 + $0x98] sm:$0xff]
      %v807 = vld [vmem:[%s4 + $0xa0] sm:$0xff]
      %v808 = vld [vmem:[%s4 + $0xa8] sm:$0xff]
      %v809 = vld [vmem:[%s4 + $0xb0] sm:$0xff]
      %v810 = vld [vmem:[%s4 + $0xb8] sm:$0xff]
      %v811 = vld [vmem:[%s4 + $0xc0] sm:$0xff]
      %v812 = vld [vmem:[%s4 + $0xc8] sm:$0xff]
      %v813 = vld [vmem:[%s4 + $0xd0] sm:$0xff]
      %v814 = vld [vmem:[%s4 + $0xd8] sm:$0xff]
      %v815 = vld [vmem:[%s4 + $0xe0] sm:$0xff]
      %v816 = vld [vmem:[%s4 + $0xe8] sm:$0xff]
      %v817 = vld [vmem:[%s4 + $0xf0] sm:$0xff]
      %v818 = vld [vmem:[%s4 + $0xf8] sm:$0xff]
      %v819 = vld [vmem:[%s5] sm:$0x3]
      %v821 = vlaneseq
      %v822 = vshrl.u32 %v821, 7
      %v823 = vsub.s32 0, %v822
      %v824 = vrot.slane %v819, %v823
      %v825 = vlaneseq
      %v826 = vshrl.u32 %v825, 7
      %v827 = vsub.s32 1, %v826
      %v828 = vrot.slane %v819, %v827
      %v863 = vunpack.c.l.b16 %v787
      %v864 = vunpack.c.h.b16 %v787
      %v865 = vunpack.c.l.b16 %v788
      %v866 = vunpack.c.h.b16 %v788
      %v867 = vunpack.c.l.b16 %v789
      %v868 = vunpack.c.h.b16 %v789
      %v869 = vunpack.c.l.b16 %v790
      %v870 = vunpack.c.h.b16 %v790
      %v871 = vunpack.c.l.b16 %v791
      %v872 = vunpack.c.h.b16 %v791
      %v873 = vunpack.c.l.b16 %v792
      %v874 = vunpack.c.h.b16 %v792
      %v875 = vunpack.c.l.b16 %v793
      %v876 = vunpack.c.h.b16 %v793
      %v877 = vunpack.c.l.b16 %v794
      %v878 = vunpack.c.h.b16 %v794
      %v879 = vunpack.c.l.b16 %v795
      %v880 = vunpack.c.h.b16 %v795
      %v881 = vunpack.c.l.b16 %v796
      %v882 = vunpack.c.h.b16 %v796
      %v883 = vunpack.c.l.b16 %v797
      %v884 = vunpack.c.h.b16 %v797
      %v885 = vunpack.c.l.b16 %v798
      %v886 = vunpack.c.h.b16 %v798
      %v887 = vunpack.c.l.b16 %v799
      %v888 = vunpack.c.h.b16 %v799
      %v889 = vunpack.c.l.b16 %v800
      %v890 = vunpack.c.h.b16 %v800
      %v891 = vunpack.c.l.b16 %v801
      %v892 = vunpack.c.h.b16 %v801
      %v893 = vunpack.c.l.b16 %v802
      %v894 = vunpack.c.h.b16 %v802
      %v895 = vunpack.c.l.b16 %v803
      %v896 = vunpack.c.h.b16 %v803
      %v897 = vunpack.c.l.b16 %v804
      %v898 = vunpack.c.h.b16 %v804
      %v899 = vunpack.c.l.b16 %v805
      %v900 = vunpack.c.h.b16 %v805
      %v901 = vunpack.c.l.b16 %v806
      %v902 = vunpack.c.h.b16 %v806
      %v903 = vunpack.c.l.b16 %v807
      %v904 = vunpack.c.h.b16 %v807
      %v905 = vunpack.c.l.b16 %v808
      %v906 = vunpack.c.h.b16 %v808
      %v907 = vunpack.c.l.b16 %v809
      %v908 = vunpack.c.h.b16 %v809
      %v909 = vunpack.c.l.b16 %v810
      %v910 = vunpack.c.h.b16 %v810
      %v911 = vunpack.c.l.b16 %v811
      %v912 = vunpack.c.h.b16 %v811
      %v913 = vunpack.c.l.b16 %v812
      %v914 = vunpack.c.h.b16 %v812
      %v915 = vunpack.c.l.b16 %v813
      %v916 = vunpack.c.h.b16 %v813
      %v917 = vunpack.c.l.b16 %v814
      %v918 = vunpack.c.h.b16 %v814
      %v919 = vunpack.c.l.b16 %v815
      %v920 = vunpack.c.h.b16 %v815
      %v921 = vunpack.c.l.b16 %v816
      %v922 = vunpack.c.h.b16 %v816
      %v923 = vunpack.c.l.b16 %v817
      %v924 = vunpack.c.h.b16 %v817
      %v925 = vunpack.c.l.b16 %v818
      %v926 = vunpack.c.h.b16 %v818
      %v927 = vpack.c.b16 %v865, %v863
      %v928 = vpack.c.b16 %v866, %v864
      %v929 = vpack.c.b16 %v869, %v867
      %v930 = vpack.c.b16 %v870, %v868
      %v931 = vpack.c.b16 %v873, %v871
      %v932 = vpack.c.b16 %v874, %v872
      %v933 = vpack.c.b16 %v877, %v875
      %v934 = vpack.c.b16 %v878, %v876
      %v935 = vpack.c.b16 %v881, %v879
      %v936 = vpack.c.b16 %v882, %v880
      %v937 = vpack.c.b16 %v885, %v883
      %v938 = vpack.c.b16 %v886, %v884
      %v939 = vpack.c.b16 %v889, %v887
      %v940 = vpack.c.b16 %v890, %v888
      %v941 = vpack.c.b16 %v893, %v891
      %v942 = vpack.c.b16 %v894, %v892
      %v943 = vpack.c.b16 %v897, %v895
      %v944 = vpack.c.b16 %v898, %v896
      %v945 = vpack.c.b16 %v901, %v899
      %v946 = vpack.c.b16 %v902, %v900
      %v947 = vpack.c.b16 %v905, %v903
      %v948 = vpack.c.b16 %v906, %v904
      %v949 = vpack.c.b16 %v909, %v907
      %v950 = vpack.c.b16 %v910, %v908
      %v951 = vpack.c.b16 %v913, %v911
      %v952 = vpack.c.b16 %v914, %v912
      %v953 = vpack.c.b16 %v917, %v915
      %v954 = vpack.c.b16 %v918, %v916
      %v955 = vpack.c.b16 %v921, %v919
      %v956 = vpack.c.b16 %v922, %v920
      %v957 = vpack.c.b16 %v925, %v923
      %v958 = vpack.c.b16 %v926, %v924
      %991 = vmatprep.subr.bf16.mxu0 %v928
      %992 = vmatpush1.bf16.msra.mxu0 %v927
      %993 = vmatprep.subr.bf16.mxu0 %v930
      %994 = vmatpush1.bf16.msra.mxu0 %v929
      %995 = vmatprep.subr.bf16.mxu0 %v932
      %996 = vmatpush1.bf16.msra.mxu0 %v931
      %997 = vmatprep.subr.bf16.mxu0 %v934
      %998 = vmatpush1.bf16.msra.mxu0 %v933
      %999 = vmatprep.subr.bf16.mxu0 %v936
      %1000 = vmatpush1.bf16.msra.mxu0 %v935
      %1001 = vmatprep.subr.bf16.mxu0 %v938
      %1002 = vmatpush1.bf16.msra.mxu0 %v937
      %1003 = vmatprep.subr.bf16.mxu0 %v940
      %1004 = vmatpush1.bf16.msra.mxu0 %v939
      %1005 = vmatprep.subr.bf16.mxu0 %v942
      %1006 = vmatpush1.bf16.msra.mxu0 %v941
      %1007 = vmatprep.subr.bf16.mxu0 %v944
      %1008 = vmatpush1.bf16.msra.mxu0 %v943
      %1009 = vmatprep.subr.bf16.mxu0 %v946
      %1010 = vmatpush1.bf16.msra.mxu0 %v945
      %1011 = vmatprep.subr.bf16.mxu0 %v948
      %1012 = vmatpush1.bf16.msra.mxu0 %v947
      %1013 = vmatprep.subr.bf16.mxu0 %v950
      %1014 = vmatpush1.bf16.msra.mxu0 %v949
      %1015 = vmatprep.subr.bf16.mxu0 %v952
      %1016 = vmatpush1.bf16.msra.mxu0 %v951
      %1017 = vmatprep.subr.bf16.mxu0 %v954
      %1018 = vmatpush1.bf16.msra.mxu0 %v953
      %1019 = vmatprep.subr.bf16.mxu0 %v956
      %1020 = vmatpush1.bf16.msra.mxu0 %v955
      %1021 = vmatprep.subr.bf16.mxu0 %v958
      %1022 = vmatpush1.bf16.msra.mxu0 %v957
      %1023 = vmatprep.mubr.bf16.mxu0 %v772
      %1024 = vmatmul.mubr.bf16.gmra.mrb[0].mxu0 %v771
      %v1025 = vpop.f32.mrb[0].mxu0
      %v1026 = vadd.f32 %v824, %v1025
      %v1027 = vpop.f32.mrb[0].mxu0
      %v1028 = vadd.f32 %v828, %v1027
      %v1029 = vpop.f32.mrb[0].mxu0
      %v1030 = vadd.f32 %v824, %v1029
      %v1031 = vpop.f32.mrb[0].mxu0
      %v1032 = vadd.f32 %v828, %v1031
      %1033 = vmatprep.mubr.bf16.mxu0 %v774
      %1034 = vmatmul.mubr.bf16.gmra.mrb[0].mxu0 %v773
      %v1035 = vpop.f32.mrb[0].mxu0
      %v1036 = vadd.f32 %v824, %v1035
      %v1037 = vpop.f32.mrb[0].mxu0
      %v1038 = vadd.f32 %v828, %v1037
      %v1039 = vpop.f32.mrb[0].mxu0
      %v1040 = vadd.f32 %v824, %v1039
      %v1041 = vpop.f32.mrb[0].mxu0
      %v1042 = vadd.f32 %v828, %v1041
      %1043 = vmatprep.mubr.bf16.mxu0 %v776
      %1044 = vmatmul.mubr.bf16.gmra.mrb[0].mxu0 %v775
      %v1045 = vpop.f32.mrb[0].mxu0
      %v1046 = vadd.f32 %v824, %v1045
      %v1047 = vpop.f32.mrb[0].mxu0
      %v1048 = vadd.f32 %v828, %v1047
      %v1049 = vpop.f32.mrb[0].mxu0
      %v1050 = vadd.f32 %v824, %v1049
      %v1051 = vpop.f32.mrb[0].mxu0
      %v1052 = vadd.f32 %v828, %v1051
      %1053 = vmatprep.mubr.bf16.mxu0 %v778
      %1054 = vmatmul.mubr.bf16.gmra.mrb[0].mxu0 %v777
      %v1055 = vpop.f32.mrb[0].mxu0
      %v1056 = vadd.f32 %v824, %v1055
      %v1057 = vpop.f32.mrb[0].mxu0
      %v1058 = vadd.f32 %v828, %v1057
      %v1059 = vpop.f32.mrb[0].mxu0
      %v1060 = vadd.f32 %v824, %v1059
      %v1061 = vpop.f32.mrb[0].mxu0
      %v1062 = vadd.f32 %v828, %v1061
      %1063 = vmatprep.mubr.bf16.mxu0 %v780
      %1064 = vmatmul.mubr.bf16.gmra.mrb[0].mxu0 %v779
      %v1065 = vpop.f32.mrb[0].mxu0
      %v1066 = vadd.f32 %v824, %v1065
      %v1067 = vpop.f32.mrb[0].mxu0
      %v1068 = vadd.f32 %v828, %v1067
      %v1069 = vpop.f32.mrb[0].mxu0
      %v1070 = vadd.f32 %v824, %v1069
      %v1071 = vpop.f32.mrb[0].mxu0
      %v1072 = vadd.f32 %v828, %v1071
      %1073 = vmatprep.mubr.bf16.mxu0 %v782
      %1074 = vmatmul.mubr.bf16.gmra.mrb[0].mxu0 %v781
      %v1075 = vpop.f32.mrb[0].mxu0
      %v1076 = vadd.f32 %v824, %v1075
      %v1077 = vpop.f32.mrb[0].mxu0
      %v1078 = vadd.f32 %v828, %v1077
      %v1079 = vpop.f32.mrb[0].mxu0
      %v1080 = vadd.f32 %v824, %v1079
      %v1081 = vpop.f32.mrb[0].mxu0
      %v1082 = vadd.f32 %v828, %v1081
      %1083 = vmatprep.mubr.bf16.mxu0 %v784
      %1084 = vmatmul.mubr.bf16.gmra.mrb[0].mxu0 %v783
      %v1085 = vpop.f32.mrb[0].mxu0
      %v1086 = vadd.f32 %v824, %v1085
      %v1087 = vpop.f32.mrb[0].mxu0
      %v1088 = vadd.f32 %v828, %v1087
      %v1089 = vpop.f32.mrb[0].mxu0
      %v1090 = vadd.f32 %v824, %v1089
      %v1091 = vpop.f32.mrb[0].mxu0
      %v1092 = vadd.f32 %v828, %v1091
      %1093 = vmatprep.mubr.bf16.mxu0 %v786
      %1094 = vmatmul.mubr.bf16.gmra.mrb[0].mxu0 %v785
      %v1095 = vpop.f32.mrb[0].mxu0
      %v1096 = vadd.f32 %v824, %v1095
      %v1097 = vpop.f32.mrb[0].mxu0
      %v1098 = vadd.f32 %v828, %v1097
      %v1099 = vpop.f32.mrb[0].mxu0
      %v1100 = vadd.f32 %v824, %v1099
      %v1101 = vpop.f32.mrb[0].mxu0
      %v1102 = vadd.f32 %v828, %v1101
      %1103 = vdwg.mxu0
      %v1104 = vmax.f32 %v1026, 0.0
      %v1105 = vmax.f32 %v1028, 0.0
      %v1106 = vmax.f32 %v1030, 0.0
      %v1107 = vmax.f32 %v1032, 0.0
      %v1108 = vmax.f32 %v1036, 0.0
      %v1109 = vmax.f32 %v1038, 0.0
      %v1110 = vmax.f32 %v1040, 0.0
      %v1111 = vmax.f32 %v1042, 0.0
      %v1112 = vmax.f32 %v1046, 0.0
      %v1113 = vmax.f32 %v1048, 0.0
      %v1114 = vmax.f32 %v1050, 0.0
      %v1115 = vmax.f32 %v1052, 0.0
      %v1116 = vmax.f32 %v1056, 0.0
      %v1117 = vmax.f32 %v1058, 0.0
      %v1118 = vmax.f32 %v1060, 0.0
      %v1119 = vmax.f32 %v1062, 0.0
      %v1120 = vmax.f32 %v1066, 0.0
      %v1121 = vmax.f32 %v1068, 0.0
      %v1122 = vmax.f32 %v1070, 0.0
      %v1123 = vmax.f32 %v1072, 0.0
      %v1124 = vmax.f32 %v1076, 0.0
      %v1125 = vmax.f32 %v1078, 0.0
      %v1126 = vmax.f32 %v1080, 0.0
      %v1127 = vmax.f32 %v1082, 0.0
      %v1128 = vmax.f32 %v1086, 0.0
      %v1129 = vmax.f32 %v1088, 0.0
      %v1130 = vmax.f32 %v1090, 0.0
      %v1131 = vmax.f32 %v1092, 0.0
      %v1132 = vmax.f32 %v1096, 0.0
      %v1133 = vmax.f32 %v1098, 0.0
      %v1134 = vmax.f32 %v1100, 0.0
      %v1135 = vmax.f32 %v1102, 0.0
      %v1136 = vld [vmem:[%s6] sm:$0x3]
      %v1138 = vlaneseq
      %v1139 = vshrl.u32 %v1138, 7
      %v1140 = vsub.s32 0, %v1139
      %v1141 = vrot.slane %v1136, %v1140
      %v1142 = vlaneseq
      %v1143 = vshrl.u32 %v1142, 7
      %v1144 = vsub.s32 1, %v1143
      %v1145 = vrot.slane %v1136, %v1144
      %v1148 = vmul.f32 %v1104, %v1141
      %v1149 = vmul.f32 %v1105, %v1145
      %v1150 = vmul.f32 %v1106, %v1141
      %v1151 = vmul.f32 %v1107, %v1145
      %v1152 = vmul.f32 %v1108, %v1141
      %v1153 = vmul.f32 %v1109, %v1145
      %v1154 = vmul.f32 %v1110, %v1141
      %v1155 = vmul.f32 %v1111, %v1145
      %v1156 = vmul.f32 %v1112, %v1141
      %v1157 = vmul.f32 %v1113, %v1145
      %v1158 = vmul.f32 %v1114, %v1141
      %v1159 = vmul.f32 %v1115, %v1145
      %v1160 = vmul.f32 %v1116, %v1141
      %v1161 = vmul.f32 %v1117, %v1145
      %v1162 = vmul.f32 %v1118, %v1141
      %v1163 = vmul.f32 %v1119, %v1145
      %v1164 = vmul.f32 %v1120, %v1141
      %v1165 = vmul.f32 %v1121, %v1145
      %v1166 = vmul.f32 %v1122, %v1141
      %v1167 = vmul.f32 %v1123, %v1145
      %v1168 = vmul.f32 %v1124, %v1141
      %v1169 = vmul.f32 %v1125, %v1145
      %v1170 = vmul.f32 %v1126, %v1141
      %v1171 = vmul.f32 %v1127, %v1145
      %v1172 = vmul.f32 %v1128, %v1141
      %v1173 = vmul.f32 %v1129, %v1145
      %v1174 = vmul.f32 %v1130, %v1141
      %v1175 = vmul.f32 %v1131, %v1145
      %v1176 = vmul.f32 %v1132, %v1141
      %v1177 = vmul.f32 %v1133, %v1145
      %v1178 = vmul.f32 %v1134, %v1141
      %v1179 = vmul.f32 %v1135, %v1145
      %v1180 = vadd.f32 %v1148, %v1149
      %1181 = vadd.xlane.f32.xlu0 %v1180
      %v1182 = vpop.xlane.xlu0 %1181
      %v1183 = vadd.f32 %v1150, %v1151
      %1184 = vadd.xlane.f32.xlu0 %v1183
      %v1185 = vpop.xlane.xlu0 %1184
      %v1186 = vadd.f32 %v1152, %v1153
      %1187 = vadd.xlane.f32.xlu0 %v1186
      %v1188 = vpop.xlane.xlu0 %1187
      %v1189 = vadd.f32 %v1154, %v1155
      %1190 = vadd.xlane.f32.xlu0 %v1189
      %v1191 = vpop.xlane.xlu0 %1190
      %v1192 = vadd.f32 %v1156, %v1157
      %1193 = vadd.xlane.f32.xlu0 %v1192
      %v1194 = vpop.xlane.xlu0 %1193
      %v1195 = vadd.f32 %v1158, %v1159
      %1196 = vadd.xlane.f32.xlu0 %v1195
      %v1197 = vpop.xlane.xlu0 %1196
      %v1198 = vadd.f32 %v1160, %v1161
      %1199 = vadd.xlane.f32.xlu0 %v1198
      %v1200 = vpop.xlane.xlu0 %1199
      %v1201 = vadd.f32 %v1162, %v1163
      %1202 = vadd.xlane.f32.xlu0 %v1201
      %v1203 = vpop.xlane.xlu0 %1202
      %v1204 = vadd.f32 %v1164, %v1165
      %1205 = vadd.xlane.f32.xlu0 %v1204
      %v1206 = vpop.xlane.xlu0 %1205
      %v1207 = vadd.f32 %v1166, %v1167
      %1208 = vadd.xlane.f32.xlu0 %v1207
      %v1209 = vpop.xlane.xlu0 %1208
      %v1210 = vadd.f32 %v1168, %v1169
      %1211 = vadd.xlane.f32.xlu0 %v1210
      %v1212 = vpop.xlane.xlu0 %1211
      %v1213 = vadd.f32 %v1170, %v1171
      %1214 = vadd.xlane.f32.xlu0 %v1213
      %v1215 = vpop.xlane.xlu0 %1214
      %v1216 = vadd.f32 %v1172, %v1173
      %1217 = vadd.xlane.f32.xlu0 %v1216
      %v1218 = vpop.xlane.xlu0 %1217
      %v1219 = vadd.f32 %v1174, %v1175
      %1220 = vadd.xlane.f32.xlu0 %v1219
      %v1221 = vpop.xlane.xlu0 %1220
      %v1222 = vadd.f32 %v1176, %v1177
      %1223 = vadd.xlane.f32.xlu0 %v1222
      %v1224 = vpop.xlane.xlu0 %1223
      %v1225 = vadd.f32 %v1178, %v1179
      %1226 = vadd.xlane.f32.xlu0 %v1225
      %v1227 = vpop.xlane.xlu0 %1226
      %v1228 = vld [vmem:[#allocation2] sm:$0x1]
      %v1230 = vlaneseq
      %v1231 = vshrl.u32 %v1230, 7
      %v1232 = vsub.s32 0, %v1231
      %v1233 = vrot.slane %v1228, %v1232
      %v1235 = vadd.f32 %v1182, %v1233
      %v1236 = vadd.f32 %v1185, %v1233
      %v1237 = vadd.f32 %v1188, %v1233
      %v1238 = vadd.f32 %v1191, %v1233
      %v1239 = vadd.f32 %v1194, %v1233
      %v1240 = vadd.f32 %v1197, %v1233
      %v1241 = vadd.f32 %v1200, %v1233
      %v1242 = vadd.f32 %v1203, %v1233
      %v1243 = vadd.f32 %v1206, %v1233
      %v1244 = vadd.f32 %v1209, %v1233
      %v1245 = vadd.f32 %v1212, %v1233
      %v1246 = vadd.f32 %v1215, %v1233
      %v1247 = vadd.f32 %v1218, %v1233
      %v1248 = vadd.f32 %v1221, %v1233
      %v1249 = vadd.f32 %v1224, %v1233
      %v1250 = vadd.f32 %v1227, %v1233
      %vm1251 = vcmask 7168
      %1252 = vst.msk [vmem:[%s331] sm:$0xff] %vm1251, %v1235
      %1253 = vst.msk [vmem:[%s331 + $0x8] sm:$0xff] %vm1251, %v1236
      %1254 = vst.msk [vmem:[%s331 + $0x10] sm:$0xff] %vm1251, %v1237
      %1255 = vst.msk [vmem:[%s331 + $0x18] sm:$0xff] %vm1251, %v1238
      %1256 = vst.msk [vmem:[%s331 + $0x20] sm:$0xff] %vm1251, %v1239
      %1257 = vst.msk [vmem:[%s331 + $0x28] sm:$0xff] %vm1251, %v1240
      %1258 = vst.msk [vmem:[%s331 + $0x30] sm:$0xff] %vm1251, %v1241
      %1259 = vst.msk [vmem:[%s331 + $0x38] sm:$0xff] %vm1251, %v1242
      %1260 = vst.msk [vmem:[%s331 + $0x40] sm:$0xff] %vm1251, %v1243
      %1261 = vst.msk [vmem:[%s331 + $0x48] sm:$0xff] %vm1251, %v1244
      %1262 = vst.msk [vmem:[%s331 + $0x50] sm:$0xff] %vm1251, %v1245
      %1263 = vst.msk [vmem:[%s331 + $0x58] sm:$0xff] %vm1251, %v1246
      %1264 = vst.msk [vmem:[%s331 + $0x60] sm:$0xff] %vm1251, %v1247
      %1265 = vst.msk [vmem:[%s331 + $0x68] sm:$0xff] %vm1251, %v1248
      %1266 = vst.msk [vmem:[%s331 + $0x70] sm:$0xff] %vm1251, %v1249
      %1267 = vst.msk [vmem:[%s331 + $0x78] sm:$0xff] %vm1251, %v1250
      %s1268 = smul.u32 16, %s21
      %p1269 = scmp.lt.s32.totalorder %s1268, 31
      %s1270 = scalar_select %p1269, %s1268, 31
      %s1271 = smul.addr %s1270, 8
      %s1272 = scalar_lea.vmem %s8, %s1271
      // Predicated region
      $region53: #{critic_forward.1} parent=51 // pred_check
        %p1273 = pneg %p217
      $region54: #{critic_forward.1} parent=51 // pred_check_branch
        %1275 = sbr.rel (%p1273) target = $region56
      $region55: #{critic_forward.1} parent=51 // pred_region
        %s1276 = smul.u32 16, %s21
      $region56: #{critic_forward.1} parent=51 // pred_fallthru
        _
    $region52: #{critic_forward.1} parent=5 // pred_fallthru
      _
    %p1277 = scmp.le.s32.totalorder 2, %s16
    // Predicated region
    $region57: #{critic_forward.1} parent=5 // pred_check
      %p1278 = pneg %p1277
    $region58: #{critic_forward.1} parent=5 // pred_check_branch
      %1280 = sbr.rel (%p1278) target = $region60
    $region59: #{critic_forward.1} parent=5 // pred_region
      %s1281 = ssub.s32 %s16, 2
      // Predicated region
      $region61: #{critic_forward.1} parent=59 // pred_check
        %p1282 = pneg %p223
      $region62: #{critic_forward.1} parent=59 // pred_check_branch
        %1284 = sbr.rel (%p1282) target = $region64
      $region63: #{critic_forward.1} parent=59 // pred_region
        %s1285 = smul.u32 16, %s22
        %p1286 = scmp.lt.s32.totalorder %s1285, 31
        %s1287 = scalar_select %p1286, %s1285, 31
        %s1288 = smul.addr %s1287, 8
        %s1289 = scalar_lea.vmem %s8, %s1288
      $region64: #{critic_forward.1} parent=59 // pred_fallthru
        _
    $region60: #{critic_forward.1} parent=5 // pred_fallthru
      _
  $region6: #{critic_forward.1} parent=0 // loop_footer
    %s20 = sadd.s32 1, %s16
  $region7: #{critic_forward.1} parent=0 // loop_footer_branch
    %15 = sbr.rel target = $region3
  $region8: #{critic_forward.1} parent=0 // loop_exit
    _

</llo_original>
